<compile_context>
chip_gen: v7x
topology: tpu7x:2x2x1
jax: 0.10.0
libtpu: 0.0.40
codegen_flags: <defaults>
</compile_context>

<pallas_src>
import jax
import jax.numpy as jnp
from jax.experimental import pallas as pl
from jax.experimental.pallas import tpu as pltpu


# ----------------------------------------------------------------------------
# Kernel
# ----------------------------------------------------------------------------
def _sep_gru_kernel(x_ref, h_ref, wx_ref, wh_ref, b_ref, o_ref):
    FH = h_ref.shape[-1]                       # folded hidden width (lane-dense)

    x = x_ref[...]                             # (bm, F*D)  native dtype
    h = h_ref[...]                             # (bm, F*H)  native dtype

    # Two MXU matmuls per tile (gates r|z|n concatenated along lanes).
    gi = jnp.dot(x, wx_ref[...], preferred_element_type=jnp.float32)   # (bm, 3FH)
    gh = jnp.dot(h, wh_ref[...], preferred_element_type=jnp.float32)   # (bm, 3FH)

    # Gate slices fall on 128-lane boundaries (FH is a multiple of 128).
    gi_r, gi_z, gi_n = gi[:, :FH], gi[:, FH:2 * FH], gi[:, 2 * FH:]
    gh_r, gh_z, gh_n = gh[:, :FH], gh[:, FH:2 * FH], gh[:, 2 * FH:]

    b_r = b_ref[0:1, :]                        # (1, FH) f32
    b_z = b_ref[1:2, :]
    b_in = b_ref[2:3, :]
    b_hn = b_ref[3:4, :]

    hf = h.astype(jnp.float32)
    r = jax.nn.sigmoid(gi_r + gh_r + b_r)
    z = jax.nn.sigmoid(gi_z + gh_z + b_z)
    n = jnp.tanh(gi_n + b_in + r * (gh_n + b_hn))
    o_ref[...] = ((1.0 - z) * n + z * hf).astype(o_ref.dtype)


# ----------------------------------------------------------------------------
# Wrapper
# ----------------------------------------------------------------------------
def sep_gru_cell(x, hx, wx, wh, b, *, fold=8, block_rows=8192):
    """Fused SepGRUCell step.

    x  : (..., D)            input
    hx : (..., H) or None    previous hidden state (None -> zeros, like PyTorch)
    wx : (fold*D, 3*fold*H)  packed input->gate weights  [r | z | n], fold-replicated
    wh : (fold*H, 3*fold*H)  packed hidden->gate weights [r | z | n], fold-replicated
    b  : (4, fold*H)         packed biases [b_r, b_z, b_in, b_hn]
    fold must match the value used in pack_sep_gru_params.
    block_rows is in LOGICAL rows (folded internally).
    """
    FD, FH = wx.shape[0], wh.shape[0]
    assert wx.shape[1] == 3 * FH and wh.shape[1] == 3 * FH and b.shape == (4, FH)
    assert FD % fold == 0 and FH % fold == 0
    D, H = FD // fold, FH // fold
    assert x.shape[-1] == D

    lead = x.shape[:-1]
    rows = 1
    for s in lead:
        rows *= s

    if hx is None:
        hx = jnp.zeros(lead + (H,), dtype=x.dtype)

    x2d = x.reshape(rows, D)
    h2d = hx.reshape(rows, H)

    # Fold `fold` logical rows onto the lane axis -> lane-dense tiles.
    pad = (-rows) % fold
    if pad:
        # Correctness fallback when rows isn't a multiple of `fold` (one small copy).
        x2d = jnp.concatenate([x2d, jnp.zeros((pad, D), x2d.dtype)], axis=0)
        h2d = jnp.concatenate([h2d, jnp.zeros((pad, H), h2d.dtype)], axis=0)
    Rf = (rows + pad) // fold
    xf = x2d.reshape(Rf, FD)
    hf = h2d.reshape(Rf, FH)

    # Row tiling (in folded rows).  Keep >=2 grid steps when there is enough
    # work so v7x's second TensorCore isn't idle; blocks are multiples of 8
    # sublanes (partial last block is clipped by Pallas).
    if Rf <= 8:
        bm = Rf                                   # single full-extent block
    else:
        target = min(max(1, block_rows // fold), pl.cdiv(Rf, 2))
        bm = max(8, (target // 8) * 8)
    grid = (pl.cdiv(Rf, bm),)

    out = pl.pallas_call(
        _sep_gru_kernel,
        out_shape=jax.ShapeDtypeStruct((Rf, FH), x.dtype),
        grid_spec=pltpu.PrefetchScalarGridSpec(
            num_scalar_prefetch=0,
            grid=grid,
            in_specs=[
                pl.BlockSpec((bm, FD), lambda i: (i, 0)),        # x tile
                pl.BlockSpec((bm, FH), lambda i: (i, 0)),        # h tile
                pl.BlockSpec((FD, 3 * FH), lambda i: (0, 0)),    # Wx (VMEM-resident)
                pl.BlockSpec((FH, 3 * FH), lambda i: (0, 0)),    # Wh (VMEM-resident)
                pl.BlockSpec((4, FH), lambda i: (0, 0)),         # biases (resident)
            ],
            out_specs=pl.BlockSpec((bm, FH), lambda i: (i, 0)),
        ),
        compiler_params=pltpu.CompilerParams(
            dimension_semantics=("parallel",),
            vmem_limit_bytes=32 * 1024 * 1024),
    )(xf, hf, wx, wh, b)

    out = out.reshape(Rf * fold, H)
    if pad:
        out = out[:rows]
    return out.reshape(*lead, H)


def pick_fold():
    """Fold factor: 8 fills the 256-wide MXU on v6e/v7x; 4 on 128-wide MXUs."""
    try:
        kind = jax.devices()[0].device_kind.lower()
    except Exception:
        return 8
    return 4 if any(v in kind for v in ("v2", "v3", "v4", "v5")) else 8


# ----------------------------------------------------------------------------
# Parameter construction / packing
# ----------------------------------------------------------------------------
def init_gru_params(key, input_size, hidden_size, dtype=jnp.float32):
    """PyTorch nn.GRUCell-style parameters: U(-1/sqrt(H), 1/sqrt(H))."""
    k = 1.0 / (hidden_size ** 0.5)
    ks = jax.random.split(key, 4)
    u = lambda kk, shape: jax.random.uniform(kk, shape, dtype, -k, k)
    return dict(
        w_ih=u(ks[0], (3 * hidden_size, input_size)),   # [W_ir; W_iz; W_in]
        w_hh=u(ks[1], (3 * hidden_size, hidden_size)),  # [W_hr; W_hz; W_hn]
        b_ih=u(ks[2], (3 * hidden_size,)),
        b_hh=u(ks[3], (3 * hidden_size,)),
    )


def pack_sep_gru_params(p1, p2, h1, h2, fold=8):
    """Pack the two GRUCells into block-diagonal, fold-replicated, gate-merged
    weights (done once in the wrapper; weights stay tiny)."""
    H = h1 + h2

    def chunks(w, h):  # (3h, ...) -> r, z, n
        return w[:h], w[h:2 * h], w[2 * h:3 * h]

    def blockdiag(a, c):
        z01 = jnp.zeros((a.shape[0], c.shape[1]), a.dtype)
        z10 = jnp.zeros((c.shape[0], a.shape[1]), c.dtype)
        return jnp.concatenate(
            [jnp.concatenate([a, z01], axis=1),
             jnp.concatenate([z10, c], axis=1)], axis=0)

    wi1, wi2 = chunks(p1["w_ih"], h1), chunks(p2["w_ih"], h2)
    wh1, wh2 = chunks(p1["w_hh"], h1), chunks(p2["w_hh"], h2)
    bi1, bi2 = chunks(p1["b_ih"], h1), chunks(p2["b_ih"], h2)
    bh1, bh2 = chunks(p1["b_hh"], h1), chunks(p2["b_hh"], h2)

    eye = jnp.eye(fold, dtype=jnp.float32)
    rep = lambda w: jnp.kron(eye, w)      # (a, b) -> (fold*a, fold*b) block-diag copies

    # Per-gate combined (block-diag over the two sub-GRUs), fold-replicated,
    # then the three gates concatenated along lanes -> 2 MXU matmuls per tile.
    wx = jnp.concatenate(
        [rep(blockdiag(wi1[g].T, wi2[g].T)) for g in range(3)], axis=1)  # (F*D, 3*F*H)
    wh = jnp.concatenate(
        [rep(blockdiag(wh1[g].T, wh2[g].T)) for g in range(3)], axis=1)  # (F*H, 3*F*H)

    tile = lambda v: jnp.tile(v, fold)    # (H,) -> (fold*H,)
    b = jnp.stack([
        tile(jnp.concatenate([bi1[0] + bh1[0], bi2[0] + bh2[0]])),   # b_r
        tile(jnp.concatenate([bi1[1] + bh1[1], bi2[1] + bh2[1]])),   # b_z
        tile(jnp.concatenate([bi1[2], bi2[2]])),                     # b_in
        tile(jnp.concatenate([bh1[2], bh2[2]])),                     # b_hn
    ]).astype(jnp.float32)                                           # (4, F*H)
    return wx, wh, b


# ----------------------------------------------------------------------------
# Plain-JAX reference (PyTorch GRUCell semantics, per segment)
# ----------------------------------------------------------------------------
def _gru_cell_ref(x, h, p):
    hs = h.shape[-1]
    gi = jnp.dot(x, p["w_ih"].T, precision="highest") + p["b_ih"]
    gh = jnp.dot(h, p["w_hh"].T, precision="highest") + p["b_hh"]
    i_r, i_z, i_n = gi[..., :hs], gi[..., hs:2 * hs], gi[..., 2 * hs:]
    h_r, h_z, h_n = gh[..., :hs], gh[..., hs:2 * hs], gh[..., 2 * hs:]
    r = jax.nn.sigmoid(i_r + h_r)
    z = jax.nn.sigmoid(i_z + h_z)
    n = jnp.tanh(i_n + r * h_n)
    return (1.0 - z) * n + z * h


def sep_gru_reference(x, hx, p1, p2, sep_idx):
    o1 = _gru_cell_ref(x[..., :sep_idx], hx[..., :sep_idx], p1)
    o2 = _gru_cell_ref(x[..., sep_idx:], hx[..., sep_idx:], p2)
    return jnp.concatenate([o1, o2], axis=-1)


# ----------------------------------------------------------------------------
if __name__ == "__main__":
    # Module config: input_size = hidden_size = 32, sep_idx = 12
    #   -> hidden_size1 = int(32 * 12 / 32) = 12, hidden_size2 = 20
    sep_idx = 12
    input_size = 32
    hidden_size = 32
    hidden1 = int(hidden_size * sep_idx / input_size)
    hidden2 = hidden_size - hidden1
    # The module's forward slices hx at sep_idx, which requires hidden1 == sep_idx.
    assert hidden1 == sep_idx

    batch = 16  # GRUCell input is (batch, input_size)

    key = jax.random.PRNGKey(0)
    kx, kh, k1, k2 = jax.random.split(key, 4)
    x = jax.random.normal(kx, (batch, input_size), dtype=jnp.float32)
    hx = jax.random.normal(kh, (batch, hidden_size), dtype=jnp.float32)

    p1 = init_gru_params(k1, sep_idx, hidden1)                  # gru1
    p2 = init_gru_params(k2, input_size - sep_idx, hidden2)     # gru2

    fold = pick_fold()                                          # 8 on v6e/v7x, 4 on v5e
    wx, wh, b = pack_sep_gru_params(p1, p2, hidden1, hidden2, fold=fold)

    out = sep_gru_cell(x, hx, wx, wh, b, fold=fold)
    out = jax.block_until_ready(out)

    ref = sep_gru_reference(x, hx, p1, p2, sep_idx)
    assert out.shape == (batch, hidden_size)
    # Tolerance allows for minor MXU-pass / transcendental differences vs XLA.
    assert jnp.allclose(out, ref, atol=1e-3, rtol=1e-3), "mismatch vs reference"

    print("KERNEL_OK")
</pallas_src>

<mosaic_0001>
module attributes {stable_mosaic.version = 11 : i64} {
  func.func @_sep_gru_kernel(%arg0: i32, %arg1: memref<2x256xf32, #tpu.memory_space<vmem>>, %arg2: memref<2x256xf32, #tpu.memory_space<vmem>>, %arg3: memref<256x768xf32, #tpu.memory_space<vmem>>, %arg4: memref<256x768xf32, #tpu.memory_space<vmem>>, %arg5: memref<4x256xf32, #tpu.memory_space<vmem>>, %arg6: memref<2x256xf32, #tpu.memory_space<vmem>>) attributes {dimension_semantics = [#tpu.dimension_semantics<parallel>], iteration_bounds = array<i64: 1>, scalar_prefetch = 0 : i64, scratch_operands = 0 : i64, tpu.core_type = #tpu.core_type<tc>, window_params = [{transform_indices = @transform_0, window_bounds = array<i64: 2, 256>}, {transform_indices = @transform_1, window_bounds = array<i64: 2, 256>}, {pipeline_mode = #tpu.pipeline_mode<synchronous>, transform_indices = @transform_2, window_bounds = array<i64: 256, 768>}, {pipeline_mode = #tpu.pipeline_mode<synchronous>, transform_indices = @transform_3, window_bounds = array<i64: 256, 768>}, {pipeline_mode = #tpu.pipeline_mode<synchronous>, transform_indices = @transform_4, window_bounds = array<i64: 4, 256>}, {transform_indices = @transform_5, window_bounds = array<i64: 2, 256>}]} {
    %c0 = arith.constant 0 : index
    %c0_0 = arith.constant 0 : index
    %0 = vector.load %arg1[%c0, %c0_0] : memref<2x256xf32, #tpu.memory_space<vmem>>, vector<2x256xf32>
    %c0_1 = arith.constant 0 : index
    %c0_2 = arith.constant 0 : index
    %1 = vector.load %arg2[%c0_1, %c0_2] : memref<2x256xf32, #tpu.memory_space<vmem>>, vector<2x256xf32>
    %c0_3 = arith.constant 0 : index
    %c0_4 = arith.constant 0 : index
    %2 = vector.load %arg3[%c0_3, %c0_4] : memref<256x768xf32, #tpu.memory_space<vmem>>, vector<256x768xf32>
    %cst = arith.constant dense<0.000000e+00> : vector<2x768xf32>
    %3 = tpu.matmul %0, %2, %cst {dimension_numbers = #tpu.dot_dimension_numbers<[1], [0], [0], [1], [0, 0, 1, 1], [], []>} : vector<2x256xf32>, vector<256x768xf32>, vector<2x768xf32> -> vector<2x768xf32>
    %c0_5 = arith.constant 0 : index
    %c0_6 = arith.constant 0 : index
    %4 = vector.load %arg4[%c0_5, %c0_6] : memref<256x768xf32, #tpu.memory_space<vmem>>, vector<256x768xf32>
    %cst_7 = arith.constant dense<0.000000e+00> : vector<2x768xf32>
    %5 = tpu.matmul %1, %4, %cst_7 {dimension_numbers = #tpu.dot_dimension_numbers<[1], [0], [0], [1], [0, 0, 1, 1], [], []>} : vector<2x256xf32>, vector<256x768xf32>, vector<2x768xf32> -> vector<2x768xf32>
    %6 = vector.extract_strided_slice %3 {offsets = [0, 0], sizes = [2, 256], strides = [1, 1]} : vector<2x768xf32> to vector<2x256xf32>
    %7 = vector.extract_strided_slice %3 {offsets = [0, 256], sizes = [2, 256], strides = [1, 1]} : vector<2x768xf32> to vector<2x256xf32>
    %8 = vector.extract_strided_slice %3 {offsets = [0, 512], sizes = [2, 256], strides = [1, 1]} : vector<2x768xf32> to vector<2x256xf32>
    %9 = vector.extract_strided_slice %5 {offsets = [0, 0], sizes = [2, 256], strides = [1, 1]} : vector<2x768xf32> to vector<2x256xf32>
    %10 = vector.extract_strided_slice %5 {offsets = [0, 256], sizes = [2, 256], strides = [1, 1]} : vector<2x768xf32> to vector<2x256xf32>
    %11 = vector.extract_strided_slice %5 {offsets = [0, 512], sizes = [2, 256], strides = [1, 1]} : vector<2x768xf32> to vector<2x256xf32>
    %c0_8 = arith.constant 0 : index
    %c0_9 = arith.constant 0 : index
    %12 = vector.load %arg5[%c0_8, %c0_9] : memref<4x256xf32, #tpu.memory_space<vmem>>, vector<1x256xf32>
    %c1 = arith.constant 1 : index
    %c0_10 = arith.constant 0 : index
    %13 = vector.load %arg5[%c1, %c0_10] : memref<4x256xf32, #tpu.memory_space<vmem>>, vector<1x256xf32>
    %c2 = arith.constant 2 : index
    %c0_11 = arith.constant 0 : index
    %14 = vector.load %arg5[%c2, %c0_11] : memref<4x256xf32, #tpu.memory_space<vmem>>, vector<1x256xf32>
    %c3 = arith.constant 3 : index
    %c0_12 = arith.constant 0 : index
    %15 = vector.load %arg5[%c3, %c0_12] : memref<4x256xf32, #tpu.memory_space<vmem>>, vector<1x256xf32>
    %16 = arith.addf %6, %9 : vector<2x256xf32>
    %17 = vector.broadcast %12 : vector<1x256xf32> to vector<2x256xf32>
    %18 = arith.addf %16, %17 : vector<2x256xf32>
    %19 = arith.negf %18 : vector<2x256xf32>
    %20 = math.exp %19 : vector<2x256xf32>
    %cst_13 = arith.constant 1.000000e+00 : f32
    %21 = vector.broadcast %cst_13 : f32 to vector<2x256xf32>
    %22 = arith.addf %21, %20 : vector<2x256xf32>
    %23 = arith.divf %21, %22 : vector<2x256xf32>
    %24 = arith.addf %7, %10 : vector<2x256xf32>
    %25 = vector.broadcast %13 : vector<1x256xf32> to vector<2x256xf32>
    %26 = arith.addf %24, %25 : vector<2x256xf32>
    %27 = arith.negf %26 : vector<2x256xf32>
    %28 = math.exp %27 : vector<2x256xf32>
    %cst_14 = arith.constant 1.000000e+00 : f32
    %29 = vector.broadcast %cst_14 : f32 to vector<2x256xf32>
    %30 = arith.addf %29, %28 : vector<2x256xf32>
    %31 = arith.divf %29, %30 : vector<2x256xf32>
    %32 = vector.broadcast %14 : vector<1x256xf32> to vector<2x256xf32>
    %33 = arith.addf %8, %32 : vector<2x256xf32>
    %34 = vector.broadcast %15 : vector<1x256xf32> to vector<2x256xf32>
    %35 = arith.addf %11, %34 : vector<2x256xf32>
    %36 = arith.mulf %23, %35 : vector<2x256xf32>
    %37 = arith.addf %33, %36 : vector<2x256xf32>
    %38 = math.tanh %37 : vector<2x256xf32>
    %cst_15 = arith.constant 1.000000e+00 : f32
    %39 = vector.broadcast %cst_15 : f32 to vector<2x256xf32>
    %40 = arith.subf %39, %31 : vector<2x256xf32>
    %41 = arith.mulf %40, %38 : vector<2x256xf32>
    %42 = arith.mulf %31, %1 : vector<2x256xf32>
    %43 = arith.addf %41, %42 : vector<2x256xf32>
    %c0_16 = arith.constant 0 : index
    %c0_17 = arith.constant 0 : index
    %44 = vector.load %arg6[%c0_16, %c0_17] : memref<2x256xf32, #tpu.memory_space<vmem>>, vector<2x256xf32>
    tpu.vector_store %arg6[%c0_16, %c0_17], %43 {strides = array<i32>} : memref<2x256xf32, #tpu.memory_space<vmem>>, vector<2x256xf32>,
    return
  }
  func.func @transform_0(%arg0: i32) -> (i32, i32) {
    %c0_i32 = arith.constant 0 : i32
    %c0_i32_0 = arith.constant 0 : i32
    return %arg0, %c0_i32 : i32, i32
  }
  func.func @transform_1(%arg0: i32) -> (i32, i32) {
    %c0_i32 = arith.constant 0 : i32
    %c0_i32_0 = arith.constant 0 : i32
    return %arg0, %c0_i32 : i32, i32
  }
  func.func @transform_2(%arg0: i32) -> (i32, i32) {
    %c0_i32 = arith.constant 0 : i32
    %c0_i32_0 = arith.constant 0 : i32
    %c0_i32_1 = arith.constant 0 : i32
    return %c0_i32, %c0_i32_0 : i32, i32
  }
  func.func @transform_3(%arg0: i32) -> (i32, i32) {
    %c0_i32 = arith.constant 0 : i32
    %c0_i32_0 = arith.constant 0 : i32
    %c0_i32_1 = arith.constant 0 : i32
    return %c0_i32, %c0_i32_0 : i32, i32
  }
  func.func @transform_4(%arg0: i32) -> (i32, i32) {
    %c0_i32 = arith.constant 0 : i32
    %c0_i32_0 = arith.constant 0 : i32
    %c0_i32_1 = arith.constant 0 : i32
    return %c0_i32, %c0_i32_0 : i32, i32
  }
  func.func @transform_5(%arg0: i32) -> (i32, i32) {
    %c0_i32 = arith.constant 0 : i32
    %c0_i32_0 = arith.constant 0 : i32
    return %arg0, %c0_i32 : i32, i32
  }
}

</mosaic_0001>

<llo_original>
// kernel: tpu_custom_call.1
$region0: #{tpu_custom_call.1}
  #allocation0 [shape = 'u32[]', space=smem, size = 0x4, offset = 0x4, fixed_abs, tag = 'smem constant byte address 0x4 - core index']
  #allocation1 [shape = 'u32[144,128]{1,0:T(1,128)}', space=vmem, size = 0x12000, scoped, tag = 'internal scratch']
  %s0 = inlined_call_operand.hbm [shape: f32[2,256], index: 0, kind: input, shape index: {}]
  %s1 = inlined_call_operand.hbm [shape: f32[2,256], index: 1, kind: input, shape index: {}]
  %s2 = inlined_call_operand.hbm [shape: f32[256,768], index: 2, kind: input, shape index: {}]
  %s3 = inlined_call_operand.hbm [shape: f32[256,768], index: 3, kind: input, shape index: {}]
  %s4 = inlined_call_operand.vmem [shape: f32[4,256], index: 4, kind: input, shape index: {}]
  %s5 = inlined_call_operand.hbm [shape: f32[2,256], index: 5, kind: output, shape index: {}]
  %s6 = sld [smem:[#allocation0]]
  $region46: #{tpu_custom_call.1} parent=0
    _
  %s8 = ssub.s32 1, %s6
  %s9 = scalar_select 0, %s8, %s6
  $region1: #{tpu_custom_call.1} parent=0
    #allocation2 [shape = 'u8[2048]{0}', space=vmem, size = 0x800, scoped, tag = 'input window, operand 0, single buffered']
    #allocation3 [shape = 's32[1]{0}', space=sflag, size = 0x4, scoped, tag = 'scoped memory for tpu_custom_call.1']
    #allocation4 [shape = 's32[1]{0}', space=sflag, size = 0x4, scoped, tag = 'scoped memory for tpu_custom_call.1']
    #allocation5 [shape = 'u8[2048]{0}', space=vmem, size = 0x800, scoped, tag = 'input window, operand 1, single buffered']
    #allocation6 [shape = 's32[1]{0}', space=sflag, size = 0x4, scoped, tag = 'scoped memory for tpu_custom_call.1']
    #allocation7 [shape = 'u8[786432]{0}', space=vmem, size = 0xc0000, scoped, tag = 'input window, operand 2, single buffered']
    #allocation8 [shape = 'u8[786432]{0}', space=vmem, size = 0xc0000, scoped, tag = 'input window, operand 3, single buffered']
    #allocation9 [shape = 's32[1]{0}', space=sflag, size = 0x4, scoped, tag = 'scoped memory for tpu_custom_call.1']
    #allocation10 [shape = 'u8[2048]{0}', space=vmem, size = 0x800, scoped, tag = 'output window, operand 0, single buffered']
    %10 = vsyncpa [#allocation3], 0
    %11 = vsyncpa [#allocation6], 0
    %12 = vsyncpa [#allocation9], 0
    %13 = vsyncpa [#allocation4], 0
    // Predicated region
    $region2: #{tpu_custom_call.1} parent=1 // pred_check
      _
    $region3: #{tpu_custom_call.1} parent=1 // pred_check_branch
      %15 = sbr.rel (0) target = $region5
    $region4: #{tpu_custom_call.1} parent=1 // pred_region
      %s17 = ssub.s32 64, 64
      %18 = vsyncadd [#allocation3], %s17
      %s20 = sshll.u32 [#allocation2], 4
      %s21 = int_to_ptr.vmem [resolvable:$true] %s20
      %23 = dma.hbm_to_vmem [thread:$0]  %s0, 64, %s21, [#allocation3]
    $region5: #{tpu_custom_call.1} parent=1 // pred_fallthru
      _
    // Predicated region
    $region6: #{tpu_custom_call.1} parent=1 // pred_check
      _
    $region7: #{tpu_custom_call.1} parent=1 // pred_check_branch
      %25 = sbr.rel (0) target = $region9
    $region8: #{tpu_custom_call.1} parent=1 // pred_region
      %s27 = ssub.s32 64, 64
      %28 = vsyncadd [#allocation6], %s27
      %s30 = sshll.u32 [#allocation5], 4
      %s31 = int_to_ptr.vmem [resolvable:$true] %s30
      %33 = dma.hbm_to_vmem [thread:$0]  %s1, 64, %s31, [#allocation6]
    $region9: #{tpu_custom_call.1} parent=1 // pred_fallthru
      _
    // Predicated region
    $region10: #{tpu_custom_call.1} parent=1 // pred_check
      _
    $region11: #{tpu_custom_call.1} parent=1 // pred_check_branch
      %35 = sbr.rel (0) target = $region13
    $region12: #{tpu_custom_call.1} parent=1 // pred_region
      %s37 = ssub.s32 24576, 24576
      %38 = vsyncadd [#allocation6], %s37
      %s39 = sshll.u32 [#allocation7], 4
      %s40 = int_to_ptr.vmem [resolvable:$true] %s39
      %45 = dma.hbm_to_vmem [thread:$0]  %s2, 24576, %s40, [#allocation6], 768, 768, 48
    $region13: #{tpu_custom_call.1} parent=1 // pred_fallthru
      _
    // Predicated region
    $region14: #{tpu_custom_call.1} parent=1 // pred_check
      _
    $region15: #{tpu_custom_call.1} parent=1 // pred_check_branch
      %47 = sbr.rel (0) target = $region17
    $region16: #{tpu_custom_call.1} parent=1 // pred_region
      %s49 = ssub.s32 24576, 24576
      %50 = vsyncadd [#allocation9], %s49
      %s51 = sshll.u32 [#allocation8], 4
      %s52 = int_to_ptr.vmem [resolvable:$true] %s51
      %57 = dma.hbm_to_vmem [thread:$0]  %s3, 24576, %s52, [#allocation9], 768, 768, 48
    $region17: #{tpu_custom_call.1} parent=1 // pred_fallthru
      _
    // Predicated region
    $region18: #{tpu_custom_call.1} parent=1 // pred_check
      _
    $region19: #{tpu_custom_call.1} parent=1 // pred_check_branch
      %59 = sbr.rel (0) target = $region21
    $region20: #{tpu_custom_call.1} parent=1 // pred_region
      _
    $region21: #{tpu_custom_call.1} parent=1 // pred_fallthru
      _
    // Predicated region
    $region22: #{tpu_custom_call.1} parent=1 // pred_check
      _
    $region23: #{tpu_custom_call.1} parent=1 // pred_check_branch
      %61 = sbr.rel (0) target = $region25
    $region24: #{tpu_custom_call.1} parent=1 // pred_region
      %62 = dma.done [#allocation3], 64
    $region25: #{tpu_custom_call.1} parent=1 // pred_fallthru
      _
    // Predicated region
    $region26: #{tpu_custom_call.1} parent=1 // pred_check
      _
    $region27: #{tpu_custom_call.1} parent=1 // pred_check_branch
      %64 = sbr.rel (0) target = $region29
    $region28: #{tpu_custom_call.1} parent=1 // pred_region
      %65 = dma.done [#allocation6], 64
    $region29: #{tpu_custom_call.1} parent=1 // pred_fallthru
      _
    // Predicated region
    $region30: #{tpu_custom_call.1} parent=1 // pred_check
      _
    $region31: #{tpu_custom_call.1} parent=1 // pred_check_branch
      %67 = sbr.rel (0) target = $region33
    $region32: #{tpu_custom_call.1} parent=1 // pred_region
      %68 = dma.done [#allocation6], 24576
    $region33: #{tpu_custom_call.1} parent=1 // pred_fallthru
      _
    // Predicated region
    $region34: #{tpu_custom_call.1} parent=1 // pred_check
      _
    $region35: #{tpu_custom_call.1} parent=1 // pred_check_branch
      %70 = sbr.rel (0) target = $region37
    $region36: #{tpu_custom_call.1} parent=1 // pred_region
      %71 = dma.done [#allocation9], 24576
    $region37: #{tpu_custom_call.1} parent=1 // pred_fallthru
      _
    %v72 = vld [vmem:[#allocation2] sm:$0xf]
    %v73 = vld [vmem:[#allocation5] sm:$0xf]
    %v74 = vld [vmem:[#allocation7] sm:$0xff]
    %v75 = vld [vmem:[#allocation7 + $0x8] sm:$0xff]
    %v76 = vld [vmem:[#allocation7 + $0x10] sm:$0xff]
    %v77 = vld [vmem:[#allocation7 + $0x18] sm:$0xff]
    %v78 = vld [vmem:[#allocation7 + $0x20] sm:$0xff]
    %v79 = vld [vmem:[#allocation7 + $0x28] sm:$0xff]
    %v80 = vld [vmem:[#allocation7 + $0x30] sm:$0xff]
    %v81 = vld [vmem:[#allocation7 + $0x38] sm:$0xff]
    %v82 = vld [vmem:[#allocation7 + $0x40] sm:$0xff]
    %v83 = vld [vmem:[#allocation7 + $0x48] sm:$0xff]
    %v84 = vld [vmem:[#allocation7 + $0x50] sm:$0xff]
    %v85 = vld [vmem:[#allocation7 + $0x58] sm:$0xff]
    %v86 = vld [vmem:[#allocation7 + $0x60] sm:$0xff]
    %v87 = vld [vmem:[#allocation7 + $0x68] sm:$0xff]
    %v88 = vld [vmem:[#allocation7 + $0x70] sm:$0xff]
    %v89 = vld [vmem:[#allocation7 + $0x78] sm:$0xff]
    %v90 = vld [vmem:[#allocation7 + $0x80] sm:$0xff]
    %v91 = vld [vmem:[#allocation7 + $0x88] sm:$0xff]
    %v92 = vld [vmem:[#allocation7 + $0x90] sm:$0xff]
    %v93 = vld [vmem:[#allocation7 + $0x98] sm:$0xff]
    %v94 = vld [vmem:[#allocation7 + $0xa0] sm:$0xff]
    %v95 = vld [vmem:[#allocation7 + $0xa8] sm:$0xff]
    %v96 = vld [vmem:[#allocation7 + $0xb0] sm:$0xff]
    %v97 = vld [vmem:[#allocation7 + $0xb8] sm:$0xff]
    %v98 = vld [vmem:[#allocation7 + $0xc0] sm:$0xff]
    %v99 = vld [vmem:[#allocation7 + $0xc8] sm:$0xff]
    %v100 = vld [vmem:[#allocation7 + $0xd0] sm:$0xff]
    %v101 = vld [vmem:[#allocation7 + $0xd8] sm:$0xff]
    %v102 = vld [vmem:[#allocation7 + $0xe0] sm:$0xff]
    %v103 = vld [vmem:[#allocation7 + $0xe8] sm:$0xff]
    %v104 = vld [vmem:[#allocation7 + $0xf0] sm:$0xff]
    %v105 = vld [vmem:[#allocation7 + $0xf8] sm:$0xff]
    %v106 = vld [vmem:[#allocation7 + $0x100] sm:$0xff]
    %v107 = vld [vmem:[#allocation7 + $0x108] sm:$0xff]
    %v108 = vld [vmem:[#allocation7 + $0x110] sm:$0xff]
    %v109 = vld [vmem:[#allocation7 + $0x118] sm:$0xff]
    %v110 = vld [vmem:[#allocation7 + $0x120] sm:$0xff]
    %v111 = vld [vmem:[#allocation7 + $0x128] sm:$0xff]
    %v112 = vld [vmem:[#allocation7 + $0x130] sm:$0xff]
    %v113 = vld [vmem:[#allocation7 + $0x138] sm:$0xff]
    %v114 = vld [vmem:[#allocation7 + $0x140] sm:$0xff]
    %v115 = vld [vmem:[#allocation7 + $0x148] sm:$0xff]
    %v116 = vld [vmem:[#allocation7 + $0x150] sm:$0xff]
    %v117 = vld [vmem:[#allocation7 + $0x158] sm:$0xff]
    %v118 = vld [vmem:[#allocation7 + $0x160] sm:$0xff]
    %v119 = vld [vmem:[#allocation7 + $0x168] sm:$0xff]
    %v120 = vld [vmem:[#allocation7 + $0x170] sm:$0xff]
    %v121 = vld [vmem:[#allocation7 + $0x178] sm:$0xff]
    %v122 = vld [vmem:[#allocation7 + $0x180] sm:$0xff]
    %v123 = vld [vmem:[#allocation7 + $0x188] sm:$0xff]
    %v124 = vld [vmem:[#allocation7 + $0x190] sm:$0xff]
    %v125 = vld [vmem:[#allocation7 + $0x198] sm:$0xff]
    %v126 = vld [vmem:[#allocation7 + $0x1a0] sm:$0xff]
    %v127 = vld [vmem:[#allocation7 + $0x1a8] sm:$0xff]
    %v128 = vld [vmem:[#allocation7 + $0x1b0] sm:$0xff]
    %v129 = vld [vmem:[#allocation7 + $0x1b8] sm:$0xff]
    %v130 = vld [vmem:[#allocation7 + $0x1c0] sm:$0xff]
    %v131 = vld [vmem:[#allocation7 + $0x1c8] sm:$0xff]
    %v132 = vld [vmem:[#allocation7 + $0x1d0] sm:$0xff]
    %v133 = vld [vmem:[#allocation7 + $0x1d8] sm:$0xff]
    %v134 = vld [vmem:[#allocation7 + $0x1e0] sm:$0xff]
    %v135 = vld [vmem:[#allocation7 + $0x1e8] sm:$0xff]
    %v136 = vld [vmem:[#allocation7 + $0x1f0] sm:$0xff]
    %v137 = vld [vmem:[#allocation7 + $0x1f8] sm:$0xff]
    %v138 = vld [vmem:[#allocation7 + $0x200] sm:$0xff]
    %v139 = vld [vmem:[#allocation7 + $0x208] sm:$0xff]
    %v140 = vld [vmem:[#allocation7 + $0x210] sm:$0xff]
    %v141 = vld [vmem:[#allocation7 + $0x218] sm:$0xff]
    %v142 = vld [vmem:[#allocation7 + $0x220] sm:$0xff]
    %v143 = vld [vmem:[#allocation7 + $0x228] sm:$0xff]
    %v144 = vld [vmem:[#allocation7 + $0x230] sm:$0xff]
    %v145 = vld [vmem:[#allocation7 + $0x238] sm:$0xff]
    %v146 = vld [vmem:[#allocation7 + $0x240] sm:$0xff]
    %v147 = vld [vmem:[#allocation7 + $0x248] sm:$0xff]
    %v148 = vld [vmem:[#allocation7 + $0x250] sm:$0xff]
    %v149 = vld [vmem:[#allocation7 + $0x258] sm:$0xff]
    %v150 = vld [vmem:[#allocation7 + $0x260] sm:$0xff]
    %v151 = vld [vmem:[#allocation7 + $0x268] sm:$0xff]
    %v152 = vld [vmem:[#allocation7 + $0x270] sm:$0xff]
    %v153 = vld [vmem:[#allocation7 + $0x278] sm:$0xff]
    %v154 = vld [vmem:[#allocation7 + $0x280] sm:$0xff]
    %v155 = vld [vmem:[#allocation7 + $0x288] sm:$0xff]
    %v156 = vld [vmem:[#allocation7 + $0x290] sm:$0xff]
    %v157 = vld [vmem:[#allocation7 + $0x298] sm:$0xff]
    %v158 = vld [vmem:[#allocation7 + $0x2a0] sm:$0xff]
    %v159 = vld [vmem:[#allocation7 + $0x2a8] sm:$0xff]
    %v160 = vld [vmem:[#allocation7 + $0x2b0] sm:$0xff]
    %v161 = vld [vmem:[#allocation7 + $0x2b8] sm:$0xff]
    %v162 = vld [vmem:[#allocation7 + $0x2c0] sm:$0xff]
    %v163 = vld [vmem:[#allocation7 + $0x2c8] sm:$0xff]
    %v164 = vld [vmem:[#allocation7 + $0x2d0] sm:$0xff]
    %v165 = vld [vmem:[#allocation7 + $0x2d8] sm:$0xff]
    %v166 = vld [vmem:[#allocation7 + $0x2e0] sm:$0xff]
    %v167 = vld [vmem:[#allocation7 + $0x2e8] sm:$0xff]
    %v168 = vld [vmem:[#allocation7 + $0x2f0] sm:$0xff]
    %v169 = vld [vmem:[#allocation7 + $0x2f8] sm:$0xff]
    %v170 = vld [vmem:[#allocation7 + $0x300] sm:$0xff]
    %v171 = vld [vmem:[#allocation7 + $0x308] sm:$0xff]
    %v172 = vld [vmem:[#allocation7 + $0x310] sm:$0xff]
    %v173 = vld [vmem:[#allocation7 + $0x318] sm:$0xff]
    %v174 = vld [vmem:[#allocation7 + $0x320] sm:$0xff]
    %v175 = vld [vmem:[#allocation7 + $0x328] sm:$0xff]
    %v176 = vld [vmem:[#allocation7 + $0x330] sm:$0xff]
    %v177 = vld [vmem:[#allocation7 + $0x338] sm:$0xff]
    %v178 = vld [vmem:[#allocation7 + $0x340] sm:$0xff]
    %v179 = vld [vmem:[#allocation7 + $0x348] sm:$0xff]
    %v180 = vld [vmem:[#allocation7 + $0x350] sm:$0xff]
    %v181 = vld [vmem:[#allocation7 + $0x358] sm:$0xff]
    %v182 = vld [vmem:[#allocation7 + $0x360] sm:$0xff]
    %v183 = vld [vmem:[#allocation7 + $0x368] sm:$0xff]
    %v184 = vld [vmem:[#allocation7 + $0x370] sm:$0xff]
    %v185 = vld [vmem:[#allocation7 + $0x378] sm:$0xff]
    %v186 = vld [vmem:[#allocation7 + $0x380] sm:$0xff]
    %v187 = vld [vmem:[#allocation7 + $0x388] sm:$0xff]
    %v188 = vld [vmem:[#allocation7 + $0x390] sm:$0xff]
    %v189 = vld [vmem:[#allocation7 + $0x398] sm:$0xff]
    %v190 = vld [vmem:[#allocation7 + $0x3a0] sm:$0xff]
    %v191 = vld [vmem:[#allocation7 + $0x3a8] sm:$0xff]
    %v192 = vld [vmem:[#allocation7 + $0x3b0] sm:$0xff]
    %v193 = vld [vmem:[#allocation7 + $0x3b8] sm:$0xff]
    %v194 = vld [vmem:[#allocation7 + $0x3c0] sm:$0xff]
    %v195 = vld [vmem:[#allocation7 + $0x3c8] sm:$0xff]
    %v196 = vld [vmem:[#allocation7 + $0x3d0] sm:$0xff]
    %v197 = vld [vmem:[#allocation7 + $0x3d8] sm:$0xff]
    %v198 = vld [vmem:[#allocation7 + $0x3e0] sm:$0xff]
    %v199 = vld [vmem:[#allocation7 + $0x3e8] sm:$0xff]
    %v200 = vld [vmem:[#allocation7 + $0x3f0] sm:$0xff]
    %v201 = vld [vmem:[#allocation7 + $0x3f8] sm:$0xff]
    %v202 = vld [vmem:[#allocation7 + $0x400] sm:$0xff]
    %v203 = vld [vmem:[#allocation7 + $0x408] sm:$0xff]
    %v204 = vld [vmem:[#allocation7 + $0x410] sm:$0xff]
    %v205 = vld [vmem:[#allocation7 + $0x418] sm:$0xff]
    %v206 = vld [vmem:[#allocation7 + $0x420] sm:$0xff]
    %v207 = vld [vmem:[#allocation7 + $0x428] sm:$0xff]
    %v208 = vld [vmem:[#allocation7 + $0x430] sm:$0xff]
    %v209 = vld [vmem:[#allocation7 + $0x438] sm:$0xff]
    %v210 = vld [vmem:[#allocation7 + $0x440] sm:$0xff]
    %v211 = vld [vmem:[#allocation7 + $0x448] sm:$0xff]
    %v212 = vld [vmem:[#allocation7 + $0x450] sm:$0xff]
    %v213 = vld [vmem:[#allocation7 + $0x458] sm:$0xff]
    %v214 = vld [vmem:[#allocation7 + $0x460] sm:$0xff]
    %v215 = vld [vmem:[#allocation7 + $0x468] sm:$0xff]
    %v216 = vld [vmem:[#allocation7 + $0x470] sm:$0xff]
    %v217 = vld [vmem:[#allocation7 + $0x478] sm:$0xff]
    %v218 = vld [vmem:[#allocation7 + $0x480] sm:$0xff]
    %v219 = vld [vmem:[#allocation7 + $0x488] sm:$0xff]
    %v220 = vld [vmem:[#allocation7 + $0x490] sm:$0xff]
    %v221 = vld [vmem:[#allocation7 + $0x498] sm:$0xff]
    %v222 = vld [vmem:[#allocation7 + $0x4a0] sm:$0xff]
    %v223 = vld [vmem:[#allocation7 + $0x4a8] sm:$0xff]
    %v224 = vld [vmem:[#allocation7 + $0x4b0] sm:$0xff]
    %v225 = vld [vmem:[#allocation7 + $0x4b8] sm:$0xff]
    %v226 = vld [vmem:[#allocation7 + $0x4c0] sm:$0xff]
    %v227 = vld [vmem:[#allocation7 + $0x4c8] sm:$0xff]
    %v228 = vld [vmem:[#allocation7 + $0x4d0] sm:$0xff]
    %v229 = vld [vmem:[#allocation7 + $0x4d8] sm:$0xff]
    %v230 = vld [vmem:[#allocation7 + $0x4e0] sm:$0xff]
    %v231 = vld [vmem:[#allocation7 + $0x4e8] sm:$0xff]
    %v232 = vld [vmem:[#allocation7 + $0x4f0] sm:$0xff]
    %v233 = vld [vmem:[#allocation7 + $0x4f8] sm:$0xff]
    %v234 = vld [vmem:[#allocation7 + $0x500] sm:$0xff]
    %v235 = vld [vmem:[#allocation7 + $0x508] sm:$0xff]
    %v236 = vld [vmem:[#allocation7 + $0x510] sm:$0xff]
    %v237 = vld [vmem:[#allocation7 + $0x518] sm:$0xff]
    %v238 = vld [vmem:[#allocation7 + $0x520] sm:$0xff]
    %v239 = vld [vmem:[#allocation7 + $0x528] sm:$0xff]
    %v240 = vld [vmem:[#allocation7 + $0x530] sm:$0xff]
    %v241 = vld [vmem:[#allocation7 + $0x538] sm:$0xff]
    %v242 = vld [vmem:[#allocation7 + $0x540] sm:$0xff]
    %v243 = vld [vmem:[#allocation7 + $0x548] sm:$0xff]
    %v244 = vld [vmem:[#allocation7 + $0x550] sm:$0xff]
    %v245 = vld [vmem:[#allocation7 + $0x558] sm:$0xff]
    %v246 = vld [vmem:[#allocation7 + $0x560] sm:$0xff]
    %v247 = vld [vmem:[#allocation7 + $0x568] sm:$0xff]
    %v248 = vld [vmem:[#allocation7 + $0x570] sm:$0xff]
    %v249 = vld [vmem:[#allocation7 + $0x578] sm:$0xff]
    %v250 = vld [vmem:[#allocation7 + $0x580] sm:$0xff]
    %v251 = vld [vmem:[#allocation7 + $0x588] sm:$0xff]
    %v252 = vld [vmem:[#allocation7 + $0x590] sm:$0xff]
    %v253 = vld [vmem:[#allocation7 + $0x598] sm:$0xff]
    %v254 = vld [vmem:[#allocation7 + $0x5a0] sm:$0xff]
    %v255 = vld [vmem:[#allocation7 + $0x5a8] sm:$0xff]
    %v256 = vld [vmem:[#allocation7 + $0x5b0] sm:$0xff]
    %v257 = vld [vmem:[#allocation7 + $0x5b8] sm:$0xff]
    %v258 = vld [vmem:[#allocation7 + $0x5c0] sm:$0xff]
    %v259 = vld [vmem:[#allocation7 + $0x5c8] sm:$0xff]
    %v260 = vld [vmem:[#allocation7 + $0x5d0] sm:$0xff]
    %v261 = vld [vmem:[#allocation7 + $0x5d8] sm:$0xff]
    %v262 = vld [vmem:[#allocation7 + $0x5e0] sm:$0xff]
    %v263 = vld [vmem:[#allocation7 + $0x5e8] sm:$0xff]
    %v264 = vld [vmem:[#allocation7 + $0x5f0] sm:$0xff]
    %v265 = vld [vmem:[#allocation7 + $0x5f8] sm:$0xff]
    %v268 = vunpack.c.l.s4 1983009808
    %v269 = vunpack.c.0.s8 %v268
    %v270 = vlaneseq
    %v271 = vshrl.u32 %v270, 7
    %v272 = vsub.s32 %v269, %v271
    %v273 = vrot.slane %v72, %v272
    %v274 = vcombine.high %v273, %v273
    %277 = vmatprep.subr.mxu0 %v75
    %278 = vmatpush1.msra.mxu0 %v74
    %279 = vmatprep.subr.mxu0 %v81
    %280 = vmatpush1.msra.mxu0 %v80
    %281 = vmatprep.subr.mxu0 %v87
    %282 = vmatpush1.msra.mxu0 %v86
    %283 = vmatprep.subr.mxu0 %v93
    %284 = vmatpush1.msra.mxu0 %v92
    %285 = vmatprep.subr.mxu0 %v99
    %286 = vmatpush1.msra.mxu0 %v98
    %287 = vmatprep.subr.mxu0 %v105
    %288 = vmatpush1.msra.mxu0 %v104
    %289 = vmatprep.subr.mxu0 %v111
    %290 = vmatpush1.msra.mxu0 %v110
    %291 = vmatprep.subr.mxu0 %v117
    %292 = vmatpush1.msra.mxu0 %v116
    %293 = vmatprep.subr.mxu0 %v123
    %294 = vmatpush1.msra.mxu0 %v122
    %295 = vmatprep.subr.mxu0 %v129
    %296 = vmatpush1.msra.mxu0 %v128
    %297 = vmatprep.subr.mxu0 %v135
    %298 = vmatpush1.msra.mxu0 %v134
    %299 = vmatprep.subr.mxu0 %v141
    %300 = vmatpush1.msra.mxu0 %v140
    %301 = vmatprep.subr.mxu0 %v147
    %302 = vmatpush1.msra.mxu0 %v146
    %303 = vmatprep.subr.mxu0 %v153
    %304 = vmatpush1.msra.mxu0 %v152
    %305 = vmatprep.subr.mxu0 %v159
    %306 = vmatpush1.msra.mxu0 %v158
    %307 = vmatprep.subr.mxu0 %v165
    %308 = vmatpush1.msra.mxu0 %v164
    %309 = vmatprep.subr.mxu0 %v171
    %310 = vmatpush1.msra.mxu0 %v170
    %311 = vmatprep.subr.mxu0 %v177
    %312 = vmatpush1.msra.mxu0 %v176
    %313 = vmatprep.subr.mxu0 %v183
    %314 = vmatpush1.msra.mxu0 %v182
    %315 = vmatprep.subr.mxu0 %v189
    %316 = vmatpush1.msra.mxu0 %v188
    %317 = vmatprep.subr.mxu0 %v195
    %318 = vmatpush1.msra.mxu0 %v194
    %319 = vmatprep.subr.mxu0 %v201
    %320 = vmatpush1.msra.mxu0 %v200
    %321 = vmatprep.subr.mxu0 %v207
    %322 = vmatpush1.msra.mxu0 %v206
    %323 = vmatprep.subr.mxu0 %v213
    %324 = vmatpush1.msra.mxu0 %v212
    %325 = vmatprep.subr.mxu0 %v219
    %326 = vmatpush1.msra.mxu0 %v218
    %327 = vmatprep.subr.mxu0 %v225
    %328 = vmatpush1.msra.mxu0 %v224
    %329 = vmatprep.subr.mxu0 %v231
    %330 = vmatpush1.msra.mxu0 %v230
    %331 = vmatprep.subr.mxu0 %v237
    %332 = vmatpush1.msra.mxu0 %v236
    %333 = vmatprep.subr.mxu0 %v243
    %334 = vmatpush1.msra.mxu0 %v242
    %335 = vmatprep.subr.mxu0 %v249
    %336 = vmatpush1.msra.mxu0 %v248
    %337 = vmatprep.subr.mxu0 %v255
    %338 = vmatpush1.msra.mxu0 %v254
    %339 = vmatprep.subr.mxu0 %v261
    %340 = vmatpush1.msra.mxu0 %v260
    %341 = vmatprep.mubr.f32.mxu0 %v274
    %342 = vmatmul.mubr.f32.gmra.mrb[0].mxu0 %v273
    %v343 = vpop.f32.mrb[0].mxu0
    %v344 = vadd.f32 0.0, %v343
    %v345 = vpop.f32.mrb[0].mxu0
    %v346 = vadd.f32 0.0, %v345
    %347 = vdwg.mxu0
    %348 = vmatprep.subr.mxu0 %v77
    %349 = vmatpush1.msra.mxu0 %v76
    %350 = vmatprep.subr.mxu0 %v83
    %351 = vmatpush1.msra.mxu0 %v82
    %352 = vmatprep.subr.mxu0 %v89
    %353 = vmatpush1.msra.mxu0 %v88
    %354 = vmatprep.subr.mxu0 %v95
    %355 = vmatpush1.msra.mxu0 %v94
    %356 = vmatprep.subr.mxu0 %v101
    %357 = vmatpush1.msra.mxu0 %v100
    %358 = vmatprep.subr.mxu0 %v107
    %359 = vmatpush1.msra.mxu0 %v106
    %360 = vmatprep.subr.mxu0 %v113
    %361 = vmatpush1.msra.mxu0 %v112
    %362 = vmatprep.subr.mxu0 %v119
    %363 = vmatpush1.msra.mxu0 %v118
    %364 = vmatprep.subr.mxu0 %v125
    %365 = vmatpush1.msra.mxu0 %v124
    %366 = vmatprep.subr.mxu0 %v131
    %367 = vmatpush1.msra.mxu0 %v130
    %368 = vmatprep.subr.mxu0 %v137
    %369 = vmatpush1.msra.mxu0 %v136
    %370 = vmatprep.subr.mxu0 %v143
    %371 = vmatpush1.msra.mxu0 %v142
    %372 = vmatprep.subr.mxu0 %v149
    %373 = vmatpush1.msra.mxu0 %v148
    %374 = vmatprep.subr.mxu0 %v155
    %375 = vmatpush1.msra.mxu0 %v154
    %376 = vmatprep.subr.mxu0 %v161
    %377 = vmatpush1.msra.mxu0 %v160
    %378 = vmatprep.subr.mxu0 %v167
    %379 = vmatpush1.msra.mxu0 %v166
    %380 = vmatprep.subr.mxu0 %v173
    %381 = vmatpush1.msra.mxu0 %v172
    %382 = vmatprep.subr.mxu0 %v179
    %383 = vmatpush1.msra.mxu0 %v178
    %384 = vmatprep.subr.mxu0 %v185
    %385 = vmatpush1.msra.mxu0 %v184
    %386 = vmatprep.subr.mxu0 %v191
    %387 = vmatpush1.msra.mxu0 %v190
    %388 = vmatprep.subr.mxu0 %v197
    %389 = vmatpush1.msra.mxu0 %v196
    %390 = vmatprep.subr.mxu0 %v203
    %391 = vmatpush1.msra.mxu0 %v202
    %392 = vmatprep.subr.mxu0 %v209
    %393 = vmatpush1.msra.mxu0 %v208
    %394 = vmatprep.subr.mxu0 %v215
    %395 = vmatpush1.msra.mxu0 %v214
    %396 = vmatprep.subr.mxu0 %v221
    %397 = vmatpush1.msra.mxu0 %v220
    %398 = vmatprep.subr.mxu0 %v227
    %399 = vmatpush1.msra.mxu0 %v226
    %400 = vmatprep.subr.mxu0 %v233
    %401 = vmatpush1.msra.mxu0 %v232
    %402 = vmatprep.subr.mxu0 %v239
    %403 = vmatpush1.msra.mxu0 %v238
    %404 = vmatprep.subr.mxu0 %v245
    %405 = vmatpush1.msra.mxu0 %v244
    %406 = vmatprep.subr.mxu0 %v251
    %407 = vmatpush1.msra.mxu0 %v250
    %408 = vmatprep.subr.mxu0 %v257
    %409 = vmatpush1.msra.mxu0 %v256
    %410 = vmatprep.subr.mxu0 %v263
    %411 = vmatpush1.msra.mxu0 %v262
    %412 = vmatprep.mubr.f32.mxu0 %v274
    %413 = vmatmul.mubr.f32.gmra.mrb[0].mxu0 %v273
    %v414 = vpop.f32.mrb[0].mxu0
    %v415 = vadd.f32 0.0, %v414
    %v416 = vpop.f32.mrb[0].mxu0
    %v417 = vadd.f32 0.0, %v416
    %418 = vdwg.mxu0
    %419 = vmatprep.subr.mxu0 %v79
    %420 = vmatpush1.msra.mxu0 %v78
    %421 = vmatprep.subr.mxu0 %v85
    %422 = vmatpush1.msra.mxu0 %v84
    %423 = vmatprep.subr.mxu0 %v91
    %424 = vmatpush1.msra.mxu0 %v90
    %425 = vmatprep.subr.mxu0 %v97
    %426 = vmatpush1.msra.mxu0 %v96
    %427 = vmatprep.subr.mxu0 %v103
    %428 = vmatpush1.msra.mxu0 %v102
    %429 = vmatprep.subr.mxu0 %v109
    %430 = vmatpush1.msra.mxu0 %v108
    %431 = vmatprep.subr.mxu0 %v115
    %432 = vmatpush1.msra.mxu0 %v114
    %433 = vmatprep.subr.mxu0 %v121
    %434 = vmatpush1.msra.mxu0 %v120
    %435 = vmatprep.subr.mxu0 %v127
    %436 = vmatpush1.msra.mxu0 %v126
    %437 = vmatprep.subr.mxu0 %v133
    %438 = vmatpush1.msra.mxu0 %v132
    %439 = vmatprep.subr.mxu0 %v139
    %440 = vmatpush1.msra.mxu0 %v138
    %441 = vmatprep.subr.mxu0 %v145
    %442 = vmatpush1.msra.mxu0 %v144
    %443 = vmatprep.subr.mxu0 %v151
    %444 = vmatpush1.msra.mxu0 %v150
    %445 = vmatprep.subr.mxu0 %v157
    %446 = vmatpush1.msra.mxu0 %v156
    %447 = vmatprep.subr.mxu0 %v163
    %448 = vmatpush1.msra.mxu0 %v162
    %449 = vmatprep.subr.mxu0 %v169
    %450 = vmatpush1.msra.mxu0 %v168
    %451 = vmatprep.subr.mxu0 %v175
    %452 = vmatpush1.msra.mxu0 %v174
    %453 = vmatprep.subr.mxu0 %v181
    %454 = vmatpush1.msra.mxu0 %v180
    %455 = vmatprep.subr.mxu0 %v187
    %456 = vmatpush1.msra.mxu0 %v186
    %457 = vmatprep.subr.mxu0 %v193
    %458 = vmatpush1.msra.mxu0 %v192
    %459 = vmatprep.subr.mxu0 %v199
    %460 = vmatpush1.msra.mxu0 %v198
    %461 = vmatprep.subr.mxu0 %v205
    %462 = vmatpush1.msra.mxu0 %v204
    %463 = vmatprep.subr.mxu0 %v211
    %464 = vmatpush1.msra.mxu0 %v210
    %465 = vmatprep.subr.mxu0 %v217
    %466 = vmatpush1.msra.mxu0 %v216
    %467 = vmatprep.subr.mxu0 %v223
    %468 = vmatpush1.msra.mxu0 %v222
    %469 = vmatprep.subr.mxu0 %v229
    %470 = vmatpush1.msra.mxu0 %v228
    %471 = vmatprep.subr.mxu0 %v235
    %472 = vmatpush1.msra.mxu0 %v234
    %473 = vmatprep.subr.mxu0 %v241
    %474 = vmatpush1.msra.mxu0 %v240
    %475 = vmatprep.subr.mxu0 %v247
    %476 = vmatpush1.msra.mxu0 %v246
    %477 = vmatprep.subr.mxu0 %v253
    %478 = vmatpush1.msra.mxu0 %v252
    %479 = vmatprep.subr.mxu0 %v259
    %480 = vmatpush1.msra.mxu0 %v258
    %481 = vmatprep.subr.mxu0 %v265
    %482 = vmatpush1.msra.mxu0 %v264
    %483 = vmatprep.mubr.f32.mxu0 %v274
    %484 = vmatmul.mubr.f32.gmra.mrb[0].mxu0 %v273
    %v485 = vpop.f32.mrb[0].mxu0
    %v486 = vadd.f32 0.0, %v485
    %v487 = vpop.f32.mrb[0].mxu0
    %v488 = vadd.f32 0.0, %v487
    %489 = vdwg.mxu0
    %v490 = vld [vmem:[#allocation8] sm:$0xff]
    %v491 = vld [vmem:[#allocation8 + $0x8] sm:$0xff]
    %v492 = vld [vmem:[#allocation8 + $0x10] sm:$0xff]
    %v493 = vld [vmem:[#allocation8 + $0x18] sm:$0xff]
    %v494 = vld [vmem:[#allocation8 + $0x20] sm:$0xff]
    %v495 = vld [vmem:[#allocation8 + $0x28] sm:$0xff]
    %v496 = vld [vmem:[#allocation8 + $0x30] sm:$0xff]
    %v497 = vld [vmem:[#allocation8 + $0x38] sm:$0xff]
    %v498 = vld [vmem:[#allocation8 + $0x40] sm:$0xff]
    %v499 = vld [vmem:[#allocation8 + $0x48] sm:$0xff]
    %v500 = vld [vmem:[#allocation8 + $0x50] sm:$0xff]
    %v501 = vld [vmem:[#allocation8 + $0x58] sm:$0xff]
    %v502 = vld [vmem:[#allocation8 + $0x60] sm:$0xff]
    %v503 = vld [vmem:[#allocation8 + $0x68] sm:$0xff]
    %v504 = vld [vmem:[#allocation8 + $0x70] sm:$0xff]
    %v505 = vld [vmem:[#allocation8 + $0x78] sm:$0xff]
    %v506 = vld [vmem:[#allocation8 + $0x80] sm:$0xff]
    %v507 = vld [vmem:[#allocation8 + $0x88] sm:$0xff]
    %v508 = vld [vmem:[#allocation8 + $0x90] sm:$0xff]
    %v509 = vld [vmem:[#allocation8 + $0x98] sm:$0xff]
    %v510 = vld [vmem:[#allocation8 + $0xa0] sm:$0xff]
    %v511 = vld [vmem:[#allocation8 + $0xa8] sm:$0xff]
    %v512 = vld [vmem:[#allocation8 + $0xb0] sm:$0xff]
    %v513 = vld [vmem:[#allocation8 + $0xb8] sm:$0xff]
    %v514 = vld [vmem:[#allocation8 + $0xc0] sm:$0xff]
    %v515 = vld [vmem:[#allocation8 + $0xc8] sm:$0xff]
    %v516 = vld [vmem:[#allocation8 + $0xd0] sm:$0xff]
    %v517 = vld [vmem:[#allocation8 + $0xd8] sm:$0xff]
    %v518 = vld [vmem:[#allocation8 + $0xe0] sm:$0xff]
    %v519 = vld [vmem:[#allocation8 + $0xe8] sm:$0xff]
    %v520 = vld [vmem:[#allocation8 + $0xf0] sm:$0xff]
    %v521 = vld [vmem:[#allocation8 + $0xf8] sm:$0xff]
    %v522 = vld [vmem:[#allocation8 + $0x100] sm:$0xff]
    %v523 = vld [vmem:[#allocation8 + $0x108] sm:$0xff]
    %v524 = vld [vmem:[#allocation8 + $0x110] sm:$0xff]
    %v525 = vld [vmem:[#allocation8 + $0x118] sm:$0xff]
    %v526 = vld [vmem:[#allocation8 + $0x120] sm:$0xff]
    %v527 = vld [vmem:[#allocation8 + $0x128] sm:$0xff]
    %v528 = vld [vmem:[#allocation8 + $0x130] sm:$0xff]
    %v529 = vld [vmem:[#allocation8 + $0x138] sm:$0xff]
    %v530 = vld [vmem:[#allocation8 + $0x140] sm:$0xff]
    %v531 = vld [vmem:[#allocation8 + $0x148] sm:$0xff]
    %v532 = vld [vmem:[#allocation8 + $0x150] sm:$0xff]
    %v533 = vld [vmem:[#allocation8 + $0x158] sm:$0xff]
    %v534 = vld [vmem:[#allocation8 + $0x160] sm:$0xff]
    %v535 = vld [vmem:[#allocation8 + $0x168] sm:$0xff]
    %v536 = vld [vmem:[#allocation8 + $0x170] sm:$0xff]
    %v537 = vld [vmem:[#allocation8 + $0x178] sm:$0xff]
    %v538 = vld [vmem:[#allocation8 + $0x180] sm:$0xff]
    %v539 = vld [vmem:[#allocation8 + $0x188] sm:$0xff]
    %v540 = vld [vmem:[#allocation8 + $0x190] sm:$0xff]
    %v541 = vld [vmem:[#allocation8 + $0x198] sm:$0xff]
    %v542 = vld [vmem:[#allocation8 + $0x1a0] sm:$0xff]
    %v543 = vld [vmem:[#allocation8 + $0x1a8] sm:$0xff]
    %v544 = vld [vmem:[#allocation8 + $0x1b0] sm:$0xff]
    %v545 = vld [vmem:[#allocation8 + $0x1b8] sm:$0xff]
    %v546 = vld [vmem:[#allocation8 + $0x1c0] sm:$0xff]
    %v547 = vld [vmem:[#allocation8 + $0x1c8] sm:$0xff]
    %v548 = vld [vmem:[#allocation8 + $0x1d0] sm:$0xff]
    %v549 = vld [vmem:[#allocation8 + $0x1d8] sm:$0xff]
    %v550 = vld [vmem:[#allocation8 + $0x1e0] sm:$0xff]
    %v551 = vld [vmem:[#allocation8 + $0x1e8] sm:$0xff]
    %v552 = vld [vmem:[#allocation8 + $0x1f0] sm:$0xff]
    %v553 = vld [vmem:[#allocation8 + $0x1f8] sm:$0xff]
    %v554 = vld [vmem:[#allocation8 + $0x200] sm:$0xff]
    %v555 = vld [vmem:[#allocation8 + $0x208] sm:$0xff]
    %v556 = vld [vmem:[#allocation8 + $0x210] sm:$0xff]
    %v557 = vld [vmem:[#allocation8 + $0x218] sm:$0xff]
    %v558 = vld [vmem:[#allocation8 + $0x220] sm:$0xff]
    %v559 = vld [vmem:[#allocation8 + $0x228] sm:$0xff]
    %v560 = vld [vmem:[#allocation8 + $0x230] sm:$0xff]
    %v561 = vld [vmem:[#allocation8 + $0x238] sm:$0xff]
    %v562 = vld [vmem:[#allocation8 + $0x240] sm:$0xff]
    %v563 = vld [vmem:[#allocation8 + $0x248] sm:$0xff]
    %v564 = vld [vmem:[#allocation8 + $0x250] sm:$0xff]
    %v565 = vld [vmem:[#allocation8 + $0x258] sm:$0xff]
    %v566 = vld [vmem:[#allocation8 + $0x260] sm:$0xff]
    %v567 = vld [vmem:[#allocation8 + $0x268] sm:$0xff]
    %v568 = vld [vmem:[#allocation8 + $0x270] sm:$0xff]
    %v569 = vld [vmem:[#allocation8 + $0x278] sm:$0xff]
    %v570 = vld [vmem:[#allocation8 + $0x280] sm:$0xff]
    %v571 = vld [vmem:[#allocation8 + $0x288] sm:$0xff]
    %v572 = vld [vmem:[#allocation8 + $0x290] sm:$0xff]
    %v573 = vld [vmem:[#allocation8 + $0x298] sm:$0xff]
    %v574 = vld [vmem:[#allocation8 + $0x2a0] sm:$0xff]
    %v575 = vld [vmem:[#allocation8 + $0x2a8] sm:$0xff]
    %v576 = vld [vmem:[#allocation8 + $0x2b0] sm:$0xff]
    %v577 = vld [vmem:[#allocation8 + $0x2b8] sm:$0xff]
    %v578 = vld [vmem:[#allocation8 + $0x2c0] sm:$0xff]
    %v579 = vld [vmem:[#allocation8 + $0x2c8] sm:$0xff]
    %v580 = vld [vmem:[#allocation8 + $0x2d0] sm:$0xff]
    %v581 = vld [vmem:[#allocation8 + $0x2d8] sm:$0xff]
    %v582 = vld [vmem:[#allocation8 + $0x2e0] sm:$0xff]
    %v583 = vld [vmem:[#allocation8 + $0x2e8] sm:$0xff]
    %v584 = vld [vmem:[#allocation8 + $0x2f0] sm:$0xff]
    %v585 = vld [vmem:[#allocation8 + $0x2f8] sm:$0xff]
    %v586 = vld [vmem:[#allocation8 + $0x300] sm:$0xff]
    %v587 = vld [vmem:[#allocation8 + $0x308] sm:$0xff]
    %v588 = vld [vmem:[#allocation8 + $0x310] sm:$0xff]
    %v589 = vld [vmem:[#allocation8 + $0x318] sm:$0xff]
    %v590 = vld [vmem:[#allocation8 + $0x320] sm:$0xff]
    %v591 = vld [vmem:[#allocation8 + $0x328] sm:$0xff]
    %v592 = vld [vmem:[#allocation8 + $0x330] sm:$0xff]
    %v593 = vld [vmem:[#allocation8 + $0x338] sm:$0xff]
    %v594 = vld [vmem:[#allocation8 + $0x340] sm:$0xff]
    %v595 = vld [vmem:[#allocation8 + $0x348] sm:$0xff]
    %v596 = vld [vmem:[#allocation8 + $0x350] sm:$0xff]
    %v597 = vld [vmem:[#allocation8 + $0x358] sm:$0xff]
    %v598 = vld [vmem:[#allocation8 + $0x360] sm:$0xff]
    %v599 = vld [vmem:[#allocation8 + $0x368] sm:$0xff]
    %v600 = vld [vmem:[#allocation8 + $0x370] sm:$0xff]
    %v601 = vld [vmem:[#allocation8 + $0x378] sm:$0xff]
    %v602 = vld [vmem:[#allocation8 + $0x380] sm:$0xff]
    %v603 = vld [vmem:[#allocation8 + $0x388] sm:$0xff]
    %v604 = vld [vmem:[#allocation8 + $0x390] sm:$0xff]
    %v605 = vld [vmem:[#allocation8 + $0x398] sm:$0xff]
    %v606 = vld [vmem:[#allocation8 + $0x3a0] sm:$0xff]
    %v607 = vld [vmem:[#allocation8 + $0x3a8] sm:$0xff]
    %v608 = vld [vmem:[#allocation8 + $0x3b0] sm:$0xff]
    %v609 = vld [vmem:[#allocation8 + $0x3b8] sm:$0xff]
    %v610 = vld [vmem:[#allocation8 + $0x3c0] sm:$0xff]
    %v611 = vld [vmem:[#allocation8 + $0x3c8] sm:$0xff]
    %v612 = vld [vmem:[#allocation8 + $0x3d0] sm:$0xff]
    %v613 = vld [vmem:[#allocation8 + $0x3d8] sm:$0xff]
    %v614 = vld [vmem:[#allocation8 + $0x3e0] sm:$0xff]
    %v615 = vld [vmem:[#allocation8 + $0x3e8] sm:$0xff]
    %v616 = vld [vmem:[#allocation8 + $0x3f0] sm:$0xff]
    %v617 = vld [vmem:[#allocation8 + $0x3f8] sm:$0xff]
    %v618 = vld [vmem:[#allocation8 + $0x400] sm:$0xff]
    %v619 = vld [vmem:[#allocation8 + $0x408] sm:$0xff]
    %v620 = vld [vmem:[#allocation8 + $0x410] sm:$0xff]
    %v621 = vld [vmem:[#allocation8 + $0x418] sm:$0xff]
    %v622 = vld [vmem:[#allocation8 + $0x420] sm:$0xff]
    %v623 = vld [vmem:[#allocation8 + $0x428] sm:$0xff]
    %v624 = vld [vmem:[#allocation8 + $0x430] sm:$0xff]
    %v625 = vld [vmem:[#allocation8 + $0x438] sm:$0xff]
    %v626 = vld [vmem:[#allocation8 + $0x440] sm:$0xff]
    %v627 = vld [vmem:[#allocation8 + $0x448] sm:$0xff]
    %v628 = vld [vmem:[#allocation8 + $0x450] sm:$0xff]
    %v629 = vld [vmem:[#allocation8 + $0x458] sm:$0xff]
    %v630 = vld [vmem:[#allocation8 + $0x460] sm:$0xff]
    %v631 = vld [vmem:[#allocation8 + $0x468] sm:$0xff]
    %v632 = vld [vmem:[#allocation8 + $0x470] sm:$0xff]
    %v633 = vld [vmem:[#allocation8 + $0x478] sm:$0xff]
    %v634 = vld [vmem:[#allocation8 + $0x480] sm:$0xff]
    %v635 = vld [vmem:[#allocation8 + $0x488] sm:$0xff]
    %v636 = vld [vmem:[#allocation8 + $0x490] sm:$0xff]
    %v637 = vld [vmem:[#allocation8 + $0x498] sm:$0xff]
    %v638 = vld [vmem:[#allocation8 + $0x4a0] sm:$0xff]
    %v639 = vld [vmem:[#allocation8 + $0x4a8] sm:$0xff]
    %v640 = vld [vmem:[#allocation8 + $0x4b0] sm:$0xff]
    %v641 = vld [vmem:[#allocation8 + $0x4b8] sm:$0xff]
    %v642 = vld [vmem:[#allocation8 + $0x4c0] sm:$0xff]
    %v643 = vld [vmem:[#allocation8 + $0x4c8] sm:$0xff]
    %v644 = vld [vmem:[#allocation8 + $0x4d0] sm:$0xff]
    %v645 = vld [vmem:[#allocation8 + $0x4d8] sm:$0xff]
    %v646 = vld [vmem:[#allocation8 + $0x4e0] sm:$0xff]
    %v647 = vld [vmem:[#allocation8 + $0x4e8] sm:$0xff]
    %v648 = vld [vmem:[#allocation8 + $0x4f0] sm:$0xff]
    %v649 = vld [vmem:[#allocation8 + $0x4f8] sm:$0xff]
    %v650 = vld [vmem:[#allocation8 + $0x500] sm:$0xff]
    %v651 = vld [vmem:[#allocation8 + $0x508] sm:$0xff]
    %v652 = vld [vmem:[#allocation8 + $0x510] sm:$0xff]
    %v653 = vld [vmem:[#allocation8 + $0x518] sm:$0xff]
    %v654 = vld [vmem:[#allocation8 + $0x520] sm:$0xff]
    %v655 = vld [vmem:[#allocation8 + $0x528] sm:$0xff]
    %v656 = vld [vmem:[#allocation8 + $0x530] sm:$0xff]
    %v657 = vld [vmem:[#allocation8 + $0x538] sm:$0xff]
    %v658 = vld [vmem:[#allocation8 + $0x540] sm:$0xff]
    %v659 = vld [vmem:[#allocation8 + $0x548] sm:$0xff]
    %v660 = vld [vmem:[#allocation8 + $0x550] sm:$0xff]
    %v661 = vld [vmem:[#allocation8 + $0x558] sm:$0xff]
    %v662 = vld [vmem:[#allocation8 + $0x560] sm:$0xff]
    %v663 = vld [vmem:[#allocation8 + $0x568] sm:$0xff]
    %v664 = vld [vmem:[#allocation8 + $0x570] sm:$0xff]
    %v665 = vld [vmem:[#allocation8 + $0x578] sm:$0xff]
    %v666 = vld [vmem:[#allocation8 + $0x580] sm:$0xff]
    %v667 = vld [vmem:[#allocation8 + $0x588] sm:$0xff]
    %v668 = vld [vmem:[#allocation8 + $0x590] sm:$0xff]
    %v669 = vld [vmem:[#allocation8 + $0x598] sm:$0xff]
    %v670 = vld [vmem:[#allocation8 + $0x5a0] sm:$0xff]
    %v671 = vld [vmem:[#allocation8 + $0x5a8] sm:$0xff]
    %v672 = vld [vmem:[#allocation8 + $0x5b0] sm:$0xff]
    %v673 = vld [vmem:[#allocation8 + $0x5b8] sm:$0xff]
    %v674 = vld [vmem:[#allocation8 + $0x5c0] sm:$0xff]
    %v675 = vld [vmem:[#allocation8 + $0x5c8] sm:$0xff]
    %v676 = vld [vmem:[#allocation8 + $0x5d0] sm:$0xff]
    %v677 = vld [vmem:[#allocation8 + $0x5d8] sm:$0xff]
    %v678 = vld [vmem:[#allocation8 + $0x5e0] sm:$0xff]
    %v679 = vld [vmem:[#allocation8 + $0x5e8] sm:$0xff]
    %v680 = vld [vmem:[#allocation8 + $0x5f0] sm:$0xff]
    %v681 = vld [vmem:[#allocation8 + $0x5f8] sm:$0xff]
    %v684 = vunpack.c.l.s4 1983009808
    %v685 = vunpack.c.0.s8 %v684
    %v686 = vlaneseq
    %v687 = vshrl.u32 %v686, 7
    %v688 = vsub.s32 %v685, %v687
    %v689 = vrot.slane %v73, %v688
    %v690 = vcombine.high %v689, %v689
    %693 = vmatprep.subr.mxu0 %v491
    %694 = vmatpush1.msra.mxu0 %v490
    %695 = vmatprep.subr.mxu0 %v497
    %696 = vmatpush1.msra.mxu0 %v496
    %697 = vmatprep.subr.mxu0 %v503
    %698 = vmatpush1.msra.mxu0 %v502
    %699 = vmatprep.subr.mxu0 %v509
    %700 = vmatpush1.msra.mxu0 %v508
    %701 = vmatprep.subr.mxu0 %v515
    %702 = vmatpush1.msra.mxu0 %v514
    %703 = vmatprep.subr.mxu0 %v521
    %704 = vmatpush1.msra.mxu0 %v520
    %705 = vmatprep.subr.mxu0 %v527
    %706 = vmatpush1.msra.mxu0 %v526
    %707 = vmatprep.subr.mxu0 %v533
    %708 = vmatpush1.msra.mxu0 %v532
    %709 = vmatprep.subr.mxu0 %v539
    %710 = vmatpush1.msra.mxu0 %v538
    %711 = vmatprep.subr.mxu0 %v545
    %712 = vmatpush1.msra.mxu0 %v544
    %713 = vmatprep.subr.mxu0 %v551
    %714 = vmatpush1.msra.mxu0 %v550
    %715 = vmatprep.subr.mxu0 %v557
    %716 = vmatpush1.msra.mxu0 %v556
    %717 = vmatprep.subr.mxu0 %v563
    %718 = vmatpush1.msra.mxu0 %v562
    %719 = vmatprep.subr.mxu0 %v569
    %720 = vmatpush1.msra.mxu0 %v568
    %721 = vmatprep.subr.mxu0 %v575
    %722 = vmatpush1.msra.mxu0 %v574
    %723 = vmatprep.subr.mxu0 %v581
    %724 = vmatpush1.msra.mxu0 %v580
    %725 = vmatprep.subr.mxu0 %v587
    %726 = vmatpush1.msra.mxu0 %v586
    %727 = vmatprep.subr.mxu0 %v593
    %728 = vmatpush1.msra.mxu0 %v592
    %729 = vmatprep.subr.mxu0 %v599
    %730 = vmatpush1.msra.mxu0 %v598
    %731 = vmatprep.subr.mxu0 %v605
    %732 = vmatpush1.msra.mxu0 %v604
    %733 = vmatprep.subr.mxu0 %v611
    %734 = vmatpush1.msra.mxu0 %v610
    %735 = vmatprep.subr.mxu0 %v617
    %736 = vmatpush1.msra.mxu0 %v616
    %737 = vmatprep.subr.mxu0 %v623
    %738 = vmatpush1.msra.mxu0 %v622
    %739 = vmatprep.subr.mxu0 %v629
    %740 = vmatpush1.msra.mxu0 %v628
    %741 = vmatprep.subr.mxu0 %v635
    %742 = vmatpush1.msra.mxu0 %v634
    %743 = vmatprep.subr.mxu0 %v641
    %744 = vmatpush1.msra.mxu0 %v640
    %745 = vmatprep.subr.mxu0 %v647
    %746 = vmatpush1.msra.mxu0 %v646
    %747 = vmatprep.subr.mxu0 %v653
    %748 = vmatpush1.msra.mxu0 %v652
    %749 = vmatprep.subr.mxu0 %v659
    %750 = vmatpush1.msra.mxu0 %v658
    %751 = vmatprep.subr.mxu0 %v665
    %752 = vmatpush1.msra.mxu0 %v664
    %753 = vmatprep.subr.mxu0 %v671
    %754 = vmatpush1.msra.mxu0 %v670
    %755 = vmatprep.subr.mxu0 %v677
    %756 = vmatpush1.msra.mxu0 %v676
    %757 = vmatprep.mubr.f32.mxu0 %v690
    %758 = vmatmul.mubr.f32.gmra.mrb[0].mxu0 %v689
    %v759 = vpop.f32.mrb[0].mxu0
    %v760 = vadd.f32 0.0, %v759
    %v761 = vpop.f32.mrb[0].mxu0
    %v762 = vadd.f32 0.0, %v761
    %763 = vdwg.mxu0
    %764 = vmatprep.subr.mxu0 %v493
    %765 = vmatpush1.msra.mxu0 %v492
    %766 = vmatprep.subr.mxu0 %v499
    %767 = vmatpush1.msra.mxu0 %v498
    %768 = vmatprep.subr.mxu0 %v505
    %769 = vmatpush1.msra.mxu0 %v504
    %770 = vmatprep.subr.mxu0 %v511
    %771 = vmatpush1.msra.mxu0 %v510
    %772 = vmatprep.subr.mxu0 %v517
    %773 = vmatpush1.msra.mxu0 %v516
    %774 = vmatprep.subr.mxu0 %v523
    %775 = vmatpush1.msra.mxu0 %v522
    %776 = vmatprep.subr.mxu0 %v529
    %777 = vmatpush1.msra.mxu0 %v528
    %778 = vmatprep.subr.mxu0 %v535
    %779 = vmatpush1.msra.mxu0 %v534
    %780 = vmatprep.subr.mxu0 %v541
    %781 = vmatpush1.msra.mxu0 %v540
    %782 = vmatprep.subr.mxu0 %v547
    %783 = vmatpush1.msra.mxu0 %v546
    %784 = vmatprep.subr.mxu0 %v553
    %785 = vmatpush1.msra.mxu0 %v552
    %786 = vmatprep.subr.mxu0 %v559
    %787 = vmatpush1.msra.mxu0 %v558
    %788 = vmatprep.subr.mxu0 %v565
    %789 = vmatpush1.msra.mxu0 %v564
    %790 = vmatprep.subr.mxu0 %v571
    %791 = vmatpush1.msra.mxu0 %v570
    %792 = vmatprep.subr.mxu0 %v577
    %793 = vmatpush1.msra.mxu0 %v576
    %794 = vmatprep.subr.mxu0 %v583
    %795 = vmatpush1.msra.mxu0 %v582
    %796 = vmatprep.subr.mxu0 %v589
    %797 = vmatpush1.msra.mxu0 %v588
    %798 = vmatprep.subr.mxu0 %v595
    %799 = vmatpush1.msra.mxu0 %v594
    %800 = vmatprep.subr.mxu0 %v601
    %801 = vmatpush1.msra.mxu0 %v600
    %802 = vmatprep.subr.mxu0 %v607
    %803 = vmatpush1.msra.mxu0 %v606
    %804 = vmatprep.subr.mxu0 %v613
    %805 = vmatpush1.msra.mxu0 %v612
    %806 = vmatprep.subr.mxu0 %v619
    %807 = vmatpush1.msra.mxu0 %v618
    %808 = vmatprep.subr.mxu0 %v625
    %809 = vmatpush1.msra.mxu0 %v624
    %810 = vmatprep.subr.mxu0 %v631
    %811 = vmatpush1.msra.mxu0 %v630
    %812 = vmatprep.subr.mxu0 %v637
    %813 = vmatpush1.msra.mxu0 %v636
    %814 = vmatprep.subr.mxu0 %v643
    %815 = vmatpush1.msra.mxu0 %v642
    %816 = vmatprep.subr.mxu0 %v649
    %817 = vmatpush1.msra.mxu0 %v648
    %818 = vmatprep.subr.mxu0 %v655
    %819 = vmatpush1.msra.mxu0 %v654
    %820 = vmatprep.subr.mxu0 %v661
    %821 = vmatpush1.msra.mxu0 %v660
    %822 = vmatprep.subr.mxu0 %v667
    %823 = vmatpush1.msra.mxu0 %v666
    %824 = vmatprep.subr.mxu0 %v673
    %825 = vmatpush1.msra.mxu0 %v672
    %826 = vmatprep.subr.mxu0 %v679
    %827 = vmatpush1.msra.mxu0 %v678
    %828 = vmatprep.mubr.f32.mxu0 %v690
    %829 = vmatmul.mubr.f32.gmra.mrb[0].mxu0 %v689
    %v830 = vpop.f32.mrb[0].mxu0
    %v831 = vadd.f32 0.0, %v830
    %v832 = vpop.f32.mrb[0].mxu0
    %v833 = vadd.f32 0.0, %v832
    %834 = vdwg.mxu0
    %835 = vmatprep.subr.mxu0 %v495
    %836 = vmatpush1.msra.mxu0 %v494
    %837 = vmatprep.subr.mxu0 %v501
    %838 = vmatpush1.msra.mxu0 %v500
    %839 = vmatprep.subr.mxu0 %v507
    %840 = vmatpush1.msra.mxu0 %v506
    %841 = vmatprep.subr.mxu0 %v513
    %842 = vmatpush1.msra.mxu0 %v512
    %843 = vmatprep.subr.mxu0 %v519
    %844 = vmatpush1.msra.mxu0 %v518
    %845 = vmatprep.subr.mxu0 %v525
    %846 = vmatpush1.msra.mxu0 %v524
    %847 = vmatprep.subr.mxu0 %v531
    %848 = vmatpush1.msra.mxu0 %v530
    %849 = vmatprep.subr.mxu0 %v537
    %850 = vmatpush1.msra.mxu0 %v536
    %851 = vmatprep.subr.mxu0 %v543
    %852 = vmatpush1.msra.mxu0 %v542
    %853 = vmatprep.subr.mxu0 %v549
    %854 = vmatpush1.msra.mxu0 %v548
    %855 = vmatprep.subr.mxu0 %v555
    %856 = vmatpush1.msra.mxu0 %v554
    %857 = vmatprep.subr.mxu0 %v561
    %858 = vmatpush1.msra.mxu0 %v560
    %859 = vmatprep.subr.mxu0 %v567
    %860 = vmatpush1.msra.mxu0 %v566
    %861 = vmatprep.subr.mxu0 %v573
    %862 = vmatpush1.msra.mxu0 %v572
    %863 = vmatprep.subr.mxu0 %v579
    %864 = vmatpush1.msra.mxu0 %v578
    %865 = vmatprep.subr.mxu0 %v585
    %866 = vmatpush1.msra.mxu0 %v584
    %867 = vmatprep.subr.mxu0 %v591
    %868 = vmatpush1.msra.mxu0 %v590
    %869 = vmatprep.subr.mxu0 %v597
    %870 = vmatpush1.msra.mxu0 %v596
    %871 = vmatprep.subr.mxu0 %v603
    %872 = vmatpush1.msra.mxu0 %v602
    %873 = vmatprep.subr.mxu0 %v609
    %874 = vmatpush1.msra.mxu0 %v608
    %875 = vmatprep.subr.mxu0 %v615
    %876 = vmatpush1.msra.mxu0 %v614
    %877 = vmatprep.subr.mxu0 %v621
    %878 = vmatpush1.msra.mxu0 %v620
    %879 = vmatprep.subr.mxu0 %v627
    %880 = vmatpush1.msra.mxu0 %v626
    %881 = vmatprep.subr.mxu0 %v633
    %882 = vmatpush1.msra.mxu0 %v632
    %883 = vmatprep.subr.mxu0 %v639
    %884 = vmatpush1.msra.mxu0 %v638
    %885 = vmatprep.subr.mxu0 %v645
    %886 = vmatpush1.msra.mxu0 %v644
    %887 = vmatprep.subr.mxu0 %v651
    %888 = vmatpush1.msra.mxu0 %v650
    %889 = vmatprep.subr.mxu0 %v657
    %890 = vmatpush1.msra.mxu0 %v656
    %891 = vmatprep.subr.mxu0 %v663
    %892 = vmatpush1.msra.mxu0 %v662
    %893 = vmatprep.subr.mxu0 %v669
    %894 = vmatpush1.msra.mxu0 %v668
    %895 = vmatprep.subr.mxu0 %v675
    %896 = vmatpush1.msra.mxu0 %v674
    %897 = vmatprep.subr.mxu0 %v681
    %898 = vmatpush1.msra.mxu0 %v680
    %899 = vmatprep.mubr.f32.mxu0 %v690
    %900 = vmatmul.mubr.f32.gmra.mrb[0].mxu0 %v689
    %v901 = vpop.f32.mrb[0].mxu0
    %v902 = vadd.f32 0.0, %v901
    %v903 = vpop.f32.mrb[0].mxu0
    %v904 = vadd.f32 0.0, %v903
    %905 = vdwg.mxu0
    %v906 = vld [vmem:[%s4] ss:$4 sm:$0x3]
    %s907 = scalar_lea.vmem %s4, 1
    %v908 = vld [vmem:[%s907] ss:$4 sm:$0x3]
    %s909 = scalar_lea.vmem %s4, 2
    %v910 = vld [vmem:[%s909] ss:$4 sm:$0x3]
    %s911 = scalar_lea.vmem %s4, 3
    %v912 = vld [vmem:[%s911] ss:$4 sm:$0x3]
    %v913 = vadd.f32 %v344, %v760
    %v914 = vadd.f32 %v346, %v762
    %v916 = vlaneseq
    %v917 = vshrl.u32 %v916, 7
    %v918 = vsub.s32 0, %v917
    %v919 = vrot.slane %v906, %v918
    %v920 = vlaneseq
    %v921 = vshrl.u32 %v920, 7
    %v922 = vsub.s32 1, %v921
    %v923 = vrot.slane %v906, %v922
    %v926 = vadd.f32 %v913, %v919
    %v927 = vadd.f32 %v914, %v923
    %v928 = vxor.u32 %v926, 2147483648
    %v929 = vxor.u32 %v927, 2147483648
    %v930 = vmul.f32 %v928, 1.442695
    %v931 = vpow.pop %v930
    %v932 = vmul.f32 %v929, 1.442695
    %v933 = vpow.pop %v932
    %v934 = vadd.f32 %v931, 1.0
    %v935 = vadd.f32 %v933, 1.0
    %v936 = vrcp.pop %v934
    %v937 = vmul.f32 1.0, %v936
    %v938 = vrcp.pop %v935
    %v939 = vmul.f32 1.0, %v938
    %v940 = vadd.f32 %v415, %v831
    %v941 = vadd.f32 %v417, %v833
    %v943 = vlaneseq
    %v944 = vshrl.u32 %v943, 7
    %v945 = vsub.s32 0, %v944
    %v946 = vrot.slane %v908, %v945
    %v947 = vlaneseq
    %v948 = vshrl.u32 %v947, 7
    %v949 = vsub.s32 1, %v948
    %v950 = vrot.slane %v908, %v949
    %v953 = vadd.f32 %v940, %v946
    %v954 = vadd.f32 %v941, %v950
    %v955 = vxor.u32 %v953, 2147483648
    %v956 = vxor.u32 %v954, 2147483648
    %v957 = vmul.f32 %v955, 1.442695
    %v958 = vpow.pop %v957
    %v959 = vmul.f32 %v956, 1.442695
    %v960 = vpow.pop %v959
    %v961 = vadd.f32 %v958, 1.0
    %v962 = vadd.f32 %v960, 1.0
    %v963 = vrcp.pop %v961
    %v964 = vmul.f32 1.0, %v963
    %v965 = vrcp.pop %v962
    %v966 = vmul.f32 1.0, %v965
    %v968 = vlaneseq
    %v969 = vshrl.u32 %v968, 7
    %v970 = vsub.s32 0, %v969
    %v971 = vrot.slane %v910, %v970
    %v972 = vlaneseq
    %v973 = vshrl.u32 %v972, 7
    %v974 = vsub.s32 1, %v973
    %v975 = vrot.slane %v910, %v974
    %v978 = vadd.f32 %v486, %v971
    %v979 = vadd.f32 %v488, %v975
    %v981 = vlaneseq
    %v982 = vshrl.u32 %v981, 7
    %v983 = vsub.s32 0, %v982
    %v984 = vrot.slane %v912, %v983
    %v985 = vlaneseq
    %v986 = vshrl.u32 %v985, 7
    %v987 = vsub.s32 1, %v986
    %v988 = vrot.slane %v912, %v987
    %v991 = vadd.f32 %v902, %v984
    %v992 = vadd.f32 %v904, %v988
    %v993 = vmul.f32 %v937, %v991
    %v994 = vmul.f32 %v939, %v992
    %v995 = vadd.f32 %v978, %v993
    %v996 = vadd.f32 %v979, %v994
    %v997 = vtanh.pop %v995
    %v998 = vtanh.pop %v996
    %v999 = vsub.f32 1.0, %v964
    %v1000 = vsub.f32 1.0, %v966
    %v1001 = vmul.f32 %v999, %v997
    %v1002 = vmul.f32 %v1000, %v998
    %v1003 = vmul.f32 %v964, %v689
    %v1004 = vmul.f32 %v966, %v690
    %v1005 = vadd.f32 %v1001, %v1003
    %v1006 = vadd.f32 %v1002, %v1004
    %v1009 = vcombine.low %v1005, %v1006
    %v1011 = vunpack.c.l.s4 1983009808
    %v1012 = vunpack.c.0.s8 %v1011
    %v1013 = vlaneseq
    %v1014 = vshrl.u32 %v1013, 7
    %v1015 = vsub.s32 %v1012, %v1014
    %v1016 = vrot.slane %v1009, %v1015
    %1018 = vst [vmem:[#allocation10] sm:$0xf] %v1016
    // Predicated region
    $region38: #{tpu_custom_call.1} parent=1 // pred_check
      _
    $region39: #{tpu_custom_call.1} parent=1 // pred_check_branch
      %1020 = sbr.rel (0) target = $region41
    $region40: #{tpu_custom_call.1} parent=1 // pred_region
      %s1022 = ssub.s32 64, 64
      %1023 = vsyncadd [#allocation4], %s1022
      %s1025 = sshll.u32 [#allocation10], 4
      %s1026 = int_to_ptr.vmem [resolvable:$true] %s1025
      %1028 = dma.vmem_to_hbm [thread:$0]  %s1026, 64, %s5, [#allocation4]
    $region41: #{tpu_custom_call.1} parent=1 // pred_fallthru
      _
    // Predicated region
    $region42: #{tpu_custom_call.1} parent=1 // pred_check
      _
    $region43: #{tpu_custom_call.1} parent=1 // pred_check_branch
      %1030 = sbr.rel (0) target = $region45
    $region44: #{tpu_custom_call.1} parent=1 // pred_region
      %1031 = dma.done [#allocation4], 64
    $region45: #{tpu_custom_call.1} parent=1 // pred_fallthru
      _
    %1032 = vsyncpa [#allocation3], 1
    %1033 = vsyncpa [#allocation6], 1
    %1034 = vsyncpa [#allocation9], 1
    %1035 = vsyncpa [#allocation4], 1

</llo_original>
